<compile_context>
chip_gen: v6e
topology: v6e:2x2x1
jax: 0.10.0
libtpu: 0.0.40
codegen_flags: <defaults>
</compile_context>

<pallas_src>
import functools

import jax
import jax.numpy as jnp
from jax.experimental import pallas as pl
from jax.experimental.pallas import tpu as pltpu

_NUM_CORES = 2  # v7x has 2 TensorCores; the extra grid group is harmless on v5e/v6e.


def _round_up(x, m):
    return ((x + m - 1) // m) * m


def contrastive_loss_kernel(x1_ref, x2_ref, lbl_ref, o_ref, acc_ref, *,
                            margin, eps, n_rows, tb):
    c = pl.program_id(0)                  # core (parallel axis)
    j = pl.program_id(1)                  # chunk within this core (reduction axis)
    bpc = pl.num_programs(1)              # blocks per core

    @pl.when(j == 0)
    def _():
        acc_ref[...] = jnp.zeros_like(acc_ref)

    x1 = x1_ref[...].astype(jnp.float32)              # (tb, D)
    x2 = x2_ref[...].astype(jnp.float32)              # (tb, D)
    lbl = lbl_ref[...].astype(jnp.float32)            # (tb, 1)

    # F.pairwise_distance(x1, x2, p=2, eps=1e-6): ||x1 - x2 + eps||_2 per row.
    diff = x1 - x2 + eps
    d2 = jnp.sum(diff * diff, axis=-1, keepdims=True)  # (tb, 1) squared distance
    d = jnp.sqrt(d2)
    hinge = jnp.maximum(margin - d, 0.0)
    per_row = (1.0 - lbl) * d2 + lbl * (hinge * hinge)  # (tb, 1)

    # Global row offset of this block (un-wrapped; phantom blocks land >= n_rows).
    block_start = (c * bpc + j) * tb

    @pl.when(block_start + tb <= n_rows)      # full in-bounds block: no mask work
    def _():
        acc_ref[...] += jnp.sum(per_row, keepdims=True)

    @pl.when(block_start + tb > n_rows)       # ragged / phantom block: mask rows
    def _():
        row = jax.lax.broadcasted_iota(jnp.int32, (tb, 1), 0) + block_start
        masked = jnp.where(row < n_rows, per_row, 0.0)
        acc_ref[...] += jnp.sum(masked, keepdims=True)

    @pl.when(j == pl.num_programs(1) - 1)
    def _():
        # Lane-dense (1, 1, 128) output block; wrapper reads element [c, 0, 0].
        o_ref[...] = jnp.broadcast_to(acc_ref[...].reshape(1, 1, 1), o_ref.shape)


def _pick_block_rows(n, d, itemsize, vmem_budget_bytes=12 * 1024 * 1024):
    """Rows per block from a total (double-buffered) VMEM byte budget."""
    d_pad = _round_up(d, 128)                  # VMEM lane padding
    per_row = 2 * d_pad * itemsize + 128 * 4   # x1 + x2 + lane-padded f32 label
    tb = vmem_budget_bytes // (2 * per_row)    # 2 = double buffering
    tb = max(32, (tb // 32) * 32)              # multiple of 32: ok for f32/bf16/int8
    tb = min(tb, _round_up(n, 32))             # never bigger than the (padded) batch
    return int(tb)


def contrastive_loss(output1, output2, label, *, margin=2.0, eps=1e-6,
                     max_block_rows=None):
    """output1/output2: (N, D) embeddings; label: (N,) in {0,1}. Returns scalar loss."""
    n, d = output1.shape
    assert output2.shape == (n, d), output2.shape

    x1 = jnp.asarray(output1)                              # keep native dtype in HBM
    x2 = jnp.asarray(output2)
    lbl = jnp.asarray(label, dtype=jnp.float32).reshape(n, 1)

    itemsize = jnp.dtype(x1.dtype).itemsize
    tb = _pick_block_rows(n, d, itemsize)
    if max_block_rows is not None:
        tb = min(tb, max(32, _round_up(max_block_rows, 32)))

    total_blocks = -(-n // tb)                 # cdiv
    bpc = -(-total_blocks // _NUM_CORES)       # blocks per core
    grid = (_NUM_CORES, bpc)

    # Phantom blocks (only possible when total_blocks is odd) wrap to block 0 and
    # are fully neutralized by the in-kernel row mask (block_start >= n there).
    def row_block(c, j):
        return ((c * bpc + j) % total_blocks, 0)

    kernel = functools.partial(
        contrastive_loss_kernel,
        margin=float(margin), eps=float(eps), n_rows=n, tb=tb)

    cost = pl.CostEstimate(
        flops=4 * n * d + 8 * n,
        transcendentals=n,
        bytes_accessed=2 * n * d * itemsize + n * 4 + _NUM_CORES * 128 * 4)

    out = pl.pallas_call(
        kernel,
        out_shape=jax.ShapeDtypeStruct((_NUM_CORES, 1, 128), jnp.float32),
        grid=grid,
        in_specs=[
            pl.BlockSpec((tb, d), row_block),
            pl.BlockSpec((tb, d), row_block),
            pl.BlockSpec((tb, 1), row_block),
        ],
        out_specs=pl.BlockSpec((1, 1, 128), lambda c, j: (c, 0, 0)),
        scratch_shapes=[pltpu.VMEM((1, 1), jnp.float32)],
        compiler_params=pltpu.CompilerParams(
            dimension_semantics=("parallel", "arbitrary"),
            vmem_limit_bytes=48 * 1024 * 1024),
        cost_estimate=cost,
    )(x1, x2, lbl)

    return jnp.sum(out[:, 0, 0]) / n


def contrastive_loss_reference(output1, output2, label, margin=2.0, eps=1e-6):
    """Pure-JAX replica of the PyTorch forward, for verification."""
    d = jnp.sqrt(jnp.sum((output1 - output2 + eps) ** 2, axis=-1))
    return jnp.mean((1.0 - label) * d * d
                    + label * jnp.maximum(margin - d, 0.0) ** 2)


if __name__ == "__main__":
    key = jax.random.PRNGKey(0)
    k1, k2, k3, k4, k5, k6 = jax.random.split(key, 6)
    margin = 2.0

    # Case 1: tiny batch (N=13, D=32) -> single ragged block, plus a wrapped
    # phantom block on the second core lane of the grid.
    n1, d1 = 13, 32
    a1 = jax.random.normal(k1, (n1, d1), dtype=jnp.float32)
    b1 = jax.random.normal(k2, (n1, d1), dtype=jnp.float32)
    l1 = jax.random.bernoulli(k3, 0.5, (n1,)).astype(jnp.float32)
    loss1 = jax.block_until_ready(contrastive_loss(a1, b1, l1, margin=margin))
    ref1 = contrastive_loss_reference(a1, b1, l1, margin=margin)
    assert loss1.shape == (), loss1.shape
    assert jnp.allclose(loss1, ref1, atol=1e-4, rtol=1e-5), (loss1, ref1)

    # Case 2: multi-block path (forced small tb) -> full blocks on both cores,
    # one ragged tail block and one wrapped phantom block.
    n2, d2 = 300, 64
    a2 = jax.random.normal(k4, (n2, d2), dtype=jnp.float32)
    b2 = jax.random.normal(k5, (n2, d2), dtype=jnp.float32)
    l2 = jax.random.bernoulli(k6, 0.5, (n2,)).astype(jnp.float32)
    loss2 = jax.block_until_ready(
        contrastive_loss(a2, b2, l2, margin=margin, max_block_rows=64))
    ref2 = contrastive_loss_reference(a2, b2, l2, margin=margin)
    assert jnp.allclose(loss2, ref2, atol=1e-4, rtol=1e-5), (loss2, ref2)

    print("KERNEL_OK")
</pallas_src>

<mosaic_0001>
module attributes {stable_mosaic.version = 11 : i64} {
  func.func @contrastive_loss_kernel(%arg0: i32, %arg1: i32, %arg2: memref<32x32xf32, #tpu.memory_space<vmem>>, %arg3: memref<32x32xf32, #tpu.memory_space<vmem>>, %arg4: memref<32x1xf32, #tpu.memory_space<vmem>>, %arg5: memref<1x1x128xf32, #tpu.memory_space<vmem>>, %arg6: memref<1x1xf32, #tpu.memory_space<vmem>>) attributes {dimension_semantics = [#tpu.dimension_semantics<parallel>, #tpu.dimension_semantics<arbitrary>], iteration_bounds = array<i64: 2, 1>, scalar_prefetch = 0 : i64, scratch_operands = 1 : i64, tpu.core_type = #tpu.core_type<tc>, window_params = [{transform_indices = @transform_0, window_bounds = array<i64: 32, 32>}, {transform_indices = @transform_1, window_bounds = array<i64: 32, 32>}, {transform_indices = @transform_2, window_bounds = array<i64: 32, 1>}, {transform_indices = @transform_3, window_bounds = array<i64: 1, 1, 128>}]} {
    %c0_i32 = arith.constant 0 : i32
    %0 = arith.cmpi eq, %arg1, %c0_i32 : i32
    %1 = arith.extui %0 : i1 to i32
    %c0_i32_0 = arith.constant 0 : i32
    %2 = arith.cmpi ne, %1, %c0_i32_0 : i32
    scf.if %2 {
      %cst_17 = arith.constant 0.000000e+00 : f32
      %37 = vector.broadcast %cst_17 : f32 to vector<1x1xf32>
      %c0_18 = arith.constant 0 : index
      %c0_19 = arith.constant 0 : index
      %38 = vector.load %arg6[%c0_18, %c0_19] : memref<1x1xf32, #tpu.memory_space<vmem>>, vector<1x1xf32>
      tpu.vector_store %arg6[%c0_18, %c0_19], %37 {strides = array<i32>} : memref<1x1xf32, #tpu.memory_space<vmem>>, vector<1x1xf32>,
    } else {
    }
    %c0 = arith.constant 0 : index
    %c0_1 = arith.constant 0 : index
    %3 = vector.load %arg2[%c0, %c0_1] : memref<32x32xf32, #tpu.memory_space<vmem>>, vector<32x32xf32>
    %c0_2 = arith.constant 0 : index
    %c0_3 = arith.constant 0 : index
    %4 = vector.load %arg3[%c0_2, %c0_3] : memref<32x32xf32, #tpu.memory_space<vmem>>, vector<32x32xf32>
    %c0_4 = arith.constant 0 : index
    %c0_5 = arith.constant 0 : index
    %5 = vector.load %arg4[%c0_4, %c0_5] : memref<32x1xf32, #tpu.memory_space<vmem>>, vector<32x1xf32>
    %6 = arith.subf %3, %4 : vector<32x32xf32>
    %cst = arith.constant 9.99999997E-7 : f32
    %7 = vector.broadcast %cst : f32 to vector<32x32xf32>
    %8 = arith.addf %6, %7 : vector<32x32xf32>
    %9 = arith.mulf %8, %8 : vector<32x32xf32>
    %cst_6 = arith.constant dense<0.000000e+00> : vector<32xf32>
    %10 = vector.multi_reduction <add>, %9, %cst_6 [1] : vector<32x32xf32> to vector<32xf32>
    %11 = vector.shape_cast %10 : vector<32xf32> to vector<32x1xf32>
    %12 = math.sqrt %11 : vector<32x1xf32>
    %cst_7 = arith.constant 2.000000e+00 : f32
    %13 = vector.broadcast %cst_7 : f32 to vector<32x1xf32>
    %14 = arith.subf %13, %12 : vector<32x1xf32>
    %cst_8 = arith.constant 0.000000e+00 : f32
    %15 = vector.broadcast %cst_8 : f32 to vector<32x1xf32>
    %16 = arith.maximumf %14, %15 : vector<32x1xf32>
    %cst_9 = arith.constant 1.000000e+00 : f32
    %17 = vector.broadcast %cst_9 : f32 to vector<32x1xf32>
    %18 = arith.subf %17, %5 : vector<32x1xf32>
    %19 = arith.mulf %18, %11 : vector<32x1xf32>
    %20 = arith.mulf %16, %16 : vector<32x1xf32>
    %21 = arith.mulf %5, %20 : vector<32x1xf32>
    %22 = arith.addf %19, %21 : vector<32x1xf32>
    %c1_i32 = arith.constant 1 : i32
    %23 = arith.muli %arg0, %c1_i32 : i32
    %24 = arith.addi %23, %arg1 : i32
    %c32_i32 = arith.constant 32 : i32
    %25 = arith.muli %24, %c32_i32 : i32
    %c32_i32_10 = arith.constant 32 : i32
    %26 = arith.addi %25, %c32_i32_10 : i32
    %c13_i32 = arith.constant 13 : i32
    %27 = arith.cmpi sle, %26, %c13_i32 : i32
    %28 = arith.extui %27 : i1 to i32
    %c0_i32_11 = arith.constant 0 : i32
    %29 = arith.cmpi ne, %28, %c0_i32_11 : i32
    scf.if %29 {
      %c0_17 = arith.constant 0 : index
      %c0_18 = arith.constant 0 : index
      %37 = vector.load %arg6[%c0_17, %c0_18] : memref<1x1xf32, #tpu.memory_space<vmem>>, vector<1x1xf32>
      %38 = vector.shape_cast %22 : vector<32x1xf32> to vector<1x32x1xf32>
      %cst_19 = arith.constant dense<0.000000e+00> : vector<1xf32>
      %39 = vector.multi_reduction <add>, %38, %cst_19 [1, 2] : vector<1x32x1xf32> to vector<1xf32>
      %40 = vector.shape_cast %39 : vector<1xf32> to vector<1x1x1xf32>
      %41 = vector.extract %40[0, 0, 0] : f32 from vector<1x1x1xf32>
      %42 = vector.broadcast %41 : f32 to vector<1x1xf32>
      %43 = arith.addf %37, %42 : vector<1x1xf32>
      %c0_20 = arith.constant 0 : index
      %c0_21 = arith.constant 0 : index
      %44 = vector.load %arg6[%c0_20, %c0_21] : memref<1x1xf32, #tpu.memory_space<vmem>>, vector<1x1xf32>
      tpu.vector_store %arg6[%c0_20, %c0_21], %43 {strides = array<i32>} : memref<1x1xf32, #tpu.memory_space<vmem>>, vector<1x1xf32>,
    } else {
    }
    %c32_i32_12 = arith.constant 32 : i32
    %30 = arith.addi %25, %c32_i32_12 : i32
    %c13_i32_13 = arith.constant 13 : i32
    %31 = arith.cmpi sgt, %30, %c13_i32_13 : i32
    %32 = arith.extui %31 : i1 to i32
    %c0_i32_14 = arith.constant 0 : i32
    %33 = arith.cmpi ne, %32, %c0_i32_14 : i32
    scf.if %33 {
      %37 = tpu.iota {dimensions = array<i32: 0>} : vector<32x1xi32>
      %38 = vector.broadcast %25 : i32 to vector<32x1xi32>
      %39 = arith.addi %37, %38 : vector<32x1xi32>
      %c13_i32_17 = arith.constant 13 : i32
      %40 = vector.broadcast %c13_i32_17 : i32 to vector<32x1xi32>
      %41 = arith.cmpi slt, %39, %40 : vector<32x1xi32>
      %cst_18 = arith.constant 0.000000e+00 : f32
      %42 = vector.broadcast %cst_18 : f32 to vector<32x1xf32>
      %43 = arith.select %41, %22, %42 : vector<32x1xi1>, vector<32x1xf32>
      %c0_19 = arith.constant 0 : index
      %c0_20 = arith.constant 0 : index
      %44 = vector.load %arg6[%c0_19, %c0_20] : memref<1x1xf32, #tpu.memory_space<vmem>>, vector<1x1xf32>
      %45 = vector.shape_cast %43 : vector<32x1xf32> to vector<1x32x1xf32>
      %cst_21 = arith.constant dense<0.000000e+00> : vector<1xf32>
      %46 = vector.multi_reduction <add>, %45, %cst_21 [1, 2] : vector<1x32x1xf32> to vector<1xf32>
      %47 = vector.shape_cast %46 : vector<1xf32> to vector<1x1x1xf32>
      %48 = vector.extract %47[0, 0, 0] : f32 from vector<1x1x1xf32>
      %49 = vector.broadcast %48 : f32 to vector<1x1xf32>
      %50 = arith.addf %44, %49 : vector<1x1xf32>
      %c0_22 = arith.constant 0 : index
      %c0_23 = arith.constant 0 : index
      %51 = vector.load %arg6[%c0_22, %c0_23] : memref<1x1xf32, #tpu.memory_space<vmem>>, vector<1x1xf32>
      tpu.vector_store %arg6[%c0_22, %c0_23], %50 {strides = array<i32>} : memref<1x1xf32, #tpu.memory_space<vmem>>, vector<1x1xf32>,
    } else {
    }
    %c0_i32_15 = arith.constant 0 : i32
    %34 = arith.cmpi eq, %arg1, %c0_i32_15 : i32
    %35 = arith.extui %34 : i1 to i32
    %c0_i32_16 = arith.constant 0 : i32
    %36 = arith.cmpi ne, %35, %c0_i32_16 : i32
    scf.if %36 {
      %c0_17 = arith.constant 0 : index
      %c0_18 = arith.constant 0 : index
      %37 = vector.load %arg6[%c0_17, %c0_18] : memref<1x1xf32, #tpu.memory_space<vmem>>, vector<1x1xf32>
      %38 = vector.shape_cast %37 : vector<1x1xf32> to vector<1x1x1xf32>
      %39 = vector.shape_cast %38 : vector<1x1x1xf32> to vector<1x1x1xf32>
      %40 = vector.broadcast %39 : vector<1x1x1xf32> to vector<1x1x128xf32>
      %c0_19 = arith.constant 0 : index
      %c0_20 = arith.constant 0 : index
      %c0_21 = arith.constant 0 : index
      %41 = vector.load %arg5[%c0_19, %c0_20, %c0_21] : memref<1x1x128xf32, #tpu.memory_space<vmem>>, vector<1x1x128xf32>
      tpu.vector_store %arg5[%c0_19, %c0_20, %c0_21], %40 {strides = array<i32>} : memref<1x1x128xf32, #tpu.memory_space<vmem>>, vector<1x1x128xf32>,
    } else {
    }
    return
  }
  func.func @transform_0(%arg0: i32, %arg1: i32) -> (i32, i32) {
    %c1_i32 = arith.constant 1 : i32
    %0 = arith.muli %arg0, %c1_i32 : i32
    %1 = arith.addi %0, %arg1 : i32
    %c1_i32_0 = arith.constant 1 : i32
    %c0_i32 = arith.constant 0 : i32
    %2 = arith.cmpi eq, %c1_i32_0, %c0_i32 : i32
    %c1_i32_1 = arith.constant 1 : i32
    %3 = arith.select %2, %c1_i32_1, %c1_i32_0 : i32
    %4 = arith.remsi %1, %3 : i32
    %c0_i32_2 = arith.constant 0 : i32
    %5 = arith.cmpi ne, %4, %c0_i32_2 : i32
    %c0_i32_3 = arith.constant 0 : i32
    %6 = arith.cmpi slt, %4, %c0_i32_3 : i32
    %c0_i32_4 = arith.constant 0 : i32
    %7 = arith.cmpi slt, %3, %c0_i32_4 : i32
    %8 = arith.xori %6, %7 : i1
    %9 = arith.andi %8, %5 : i1
    %10 = arith.addi %4, %3 : i32
    %11 = arith.select %9, %10, %4 : i32
    %c0_i32_5 = arith.constant 0 : i32
    %c0_i32_6 = arith.constant 0 : i32
    return %11, %c0_i32_5 : i32, i32
  }
  func.func @transform_1(%arg0: i32, %arg1: i32) -> (i32, i32) {
    %c1_i32 = arith.constant 1 : i32
    %0 = arith.muli %arg0, %c1_i32 : i32
    %1 = arith.addi %0, %arg1 : i32
    %c1_i32_0 = arith.constant 1 : i32
    %c0_i32 = arith.constant 0 : i32
    %2 = arith.cmpi eq, %c1_i32_0, %c0_i32 : i32
    %c1_i32_1 = arith.constant 1 : i32
    %3 = arith.select %2, %c1_i32_1, %c1_i32_0 : i32
    %4 = arith.remsi %1, %3 : i32
    %c0_i32_2 = arith.constant 0 : i32
    %5 = arith.cmpi ne, %4, %c0_i32_2 : i32
    %c0_i32_3 = arith.constant 0 : i32
    %6 = arith.cmpi slt, %4, %c0_i32_3 : i32
    %c0_i32_4 = arith.constant 0 : i32
    %7 = arith.cmpi slt, %3, %c0_i32_4 : i32
    %8 = arith.xori %6, %7 : i1
    %9 = arith.andi %8, %5 : i1
    %10 = arith.addi %4, %3 : i32
    %11 = arith.select %9, %10, %4 : i32
    %c0_i32_5 = arith.constant 0 : i32
    %c0_i32_6 = arith.constant 0 : i32
    return %11, %c0_i32_5 : i32, i32
  }
  func.func @transform_2(%arg0: i32, %arg1: i32) -> (i32, i32) {
    %c1_i32 = arith.constant 1 : i32
    %0 = arith.muli %arg0, %c1_i32 : i32
    %1 = arith.addi %0, %arg1 : i32
    %c1_i32_0 = arith.constant 1 : i32
    %c0_i32 = arith.constant 0 : i32
    %2 = arith.cmpi eq, %c1_i32_0, %c0_i32 : i32
    %c1_i32_1 = arith.constant 1 : i32
    %3 = arith.select %2, %c1_i32_1, %c1_i32_0 : i32
    %4 = arith.remsi %1, %3 : i32
    %c0_i32_2 = arith.constant 0 : i32
    %5 = arith.cmpi ne, %4, %c0_i32_2 : i32
    %c0_i32_3 = arith.constant 0 : i32
    %6 = arith.cmpi slt, %4, %c0_i32_3 : i32
    %c0_i32_4 = arith.constant 0 : i32
    %7 = arith.cmpi slt, %3, %c0_i32_4 : i32
    %8 = arith.xori %6, %7 : i1
    %9 = arith.andi %8, %5 : i1
    %10 = arith.addi %4, %3 : i32
    %11 = arith.select %9, %10, %4 : i32
    %c0_i32_5 = arith.constant 0 : i32
    %c0_i32_6 = arith.constant 0 : i32
    return %11, %c0_i32_5 : i32, i32
  }
  func.func @transform_3(%arg0: i32, %arg1: i32) -> (i32, i32, i32) {
    %c0_i32 = arith.constant 0 : i32
    %c0_i32_0 = arith.constant 0 : i32
    %c0_i32_1 = arith.constant 0 : i32
    return %arg0, %c0_i32, %c0_i32_0 : i32, i32, i32
  }
}

</mosaic_0001>

<llo_original>
// kernel: tpu_custom_call.1
$region0: #{tpu_custom_call.1}
  #allocation0 [shape = 'u32[]', space=smem, size = 0x4, offset = 0x4, fixed_abs, tag = 'smem constant byte address 0x4 - core index']
  #allocation1 [shape = 'u32[144,128]{1,0:T(1,128)}', space=vmem, size = 0x12000, scoped, tag = 'internal scratch']
  #allocation2 [shape = 'f32[1,1]{1,0:T(1,128)}', space=vmem, size = 0x200, scoped, tag = 'scratch operand']
  %s0 = inlined_call_operand.vmem [shape: f32[13,32], index: 0, kind: input, shape index: {}]
  %s1 = inlined_call_operand.hbm [shape: f32[13,32], index: 1, kind: input, shape index: {}]
  %s2 = inlined_call_operand.vmem [shape: f32[13,1], index: 2, kind: input, shape index: {}]
  %s3 = inlined_call_operand.hbm [shape: f32[2,1,128], index: 3, kind: output, shape index: {}]
  %s4 = sld [smem:[#allocation0]]
  $region65: #{tpu_custom_call.1} parent=0
    _
  %s6 = ssub.s32 1, %s4
  %s7 = scalar_select 0, %s6, %s4
  $region1: #{tpu_custom_call.1} parent=0
    #allocation3 [shape = 'u8[16384]{0}', space=vmem, size = 0x4000, scoped, tag = 'input window, operand 1, single buffered']
    #allocation4 [shape = 's32[2]{0}', space=sflag, size = 0x8, scoped, tag = 'scoped memory for tpu_custom_call.1']
    #allocation5 [shape = 's32[2]{0}', space=sflag, size = 0x8, scoped, tag = 'scoped memory for tpu_custom_call.1']
    #allocation6 [shape = 'u8[1024]{0}', space=vmem, size = 0x400, scoped, tag = 'output window, operand 0']
    %8 = vsyncpa [#allocation4], 0
    %9 = vsyncpa [#allocation5], 0
    %s10 = scalar_lea.sflag [#allocation5], 1
    %11 = vsyncpa %s10, 0
    loop: start=0, step=1, limit=4
    $region2: #{tpu_custom_call.1} parent=1 // loop_pre_header
      _
    $region3: #{tpu_custom_call.1} parent=1 // loop_header
      %s13 = sphi 0, %s17
      %p14 = scmp.ge.s32.totalorder %s13, 4
      %s20 = sphi 0, %s32
      %s21 = sphi 0, %s28
      %s22 = sphi 0, %s20
      %s23 = sphi 0, %s21
      %s24 = sphi 0, %s22
      %s25 = sphi 0, %s23
      %s33 = sphi 0, %s33
      %s35 = sphi 0, %s33
      %s36 = sphi 0, %s35
      %s50 = sphi 0, %s36
      %s54 = sphi 0, %s54
      %s56 = sphi 0, %s54
      %s57 = sphi 0, %s56
      %s71 = sphi 0, %s57
      %s75 = sphi 0, %s75
      %s77 = sphi 0, %s75
      %s78 = sphi 0, %s77
      %s92 = sphi 0, %s78
      %s98 = sphi 0, %s100
      %s101 = sphi 0, %s98
      %s102 = sphi 0, %s101
      %s118 = sphi 0, %s102
    $region4: #{tpu_custom_call.1} parent=1 // loop_header_branch
      %16 = sbr.rel (%p14) target = $region8
    $region5: #{tpu_custom_call.1} parent=1 // loop_body
      %s18 = ssub.s32 %s13, 1
      %s19 = ssub.s32 %s13, 2
      %s26 = sadd.s32 1, %s21
      %p27 = scmp.ge.s32.totalorder %s26, 1
      %s28 = scalar_select %p27, 0, %s26
      %s29 = sadd.s32 1, %s20
      %s30 = scalar_select %p27, %s29, %s20
      %p31 = scmp.ge.s32.totalorder %s30, 2
      %s32 = scalar_select %p31, 0, %s30
      %s34 = sadd.s32 %s33, 1
      %p37 = scmp.eq.s32.totalorder %s13, 1
      %p38 = scmp.ne.s32.totalorder %s33, %s35
      %p39 = scmp.eq.s32.totalorder %s13, 0
      %p40 = por %p38, %p39
      %p41 = scmp.ne.s32.totalorder %s33, %s35
      %p42 = scmp.eq.s32.totalorder %s18, 1
      %p43 = por %p41, %p42
      %p44 = scmp.ne.s32.totalorder %s35, %s36
      %p45 = scmp.eq.s32.totalorder %s18, 0
      %p46 = por %p44, %p45
      %p47 = scmp.ne.s32.totalorder %s35, %s36
      %p48 = scmp.eq.s32.totalorder %s19, 1
      %p49 = por %p47, %p48
      %p51 = scmp.ne.s32.totalorder %s36, %s50
      %p52 = scmp.eq.s32.totalorder %s19, 0
      %p53 = por %p51, %p52
      %s55 = sadd.s32 %s54, 1
      %p58 = scmp.eq.s32.totalorder %s13, 1
      %p59 = scmp.ne.s32.totalorder %s54, %s56
      %p60 = scmp.eq.s32.totalorder %s13, 0
      %p61 = por %p59, %p60
      %p62 = scmp.ne.s32.totalorder %s54, %s56
      %p63 = scmp.eq.s32.totalorder %s18, 1
      %p64 = por %p62, %p63
      %p65 = scmp.ne.s32.totalorder %s56, %s57
      %p66 = scmp.eq.s32.totalorder %s18, 0
      %p67 = por %p65, %p66
      %p68 = scmp.ne.s32.totalorder %s56, %s57
      %p69 = scmp.eq.s32.totalorder %s19, 1
      %p70 = por %p68, %p69
      %p72 = scmp.ne.s32.totalorder %s57, %s71
      %p73 = scmp.eq.s32.totalorder %s19, 0
      %p74 = por %p72, %p73
      %s76 = sadd.s32 %s75, 1
      %p79 = scmp.eq.s32.totalorder %s13, 1
      %p80 = scmp.ne.s32.totalorder %s75, %s77
      %p81 = scmp.eq.s32.totalorder %s13, 0
      %p82 = por %p80, %p81
      %p83 = scmp.ne.s32.totalorder %s75, %s77
      %p84 = scmp.eq.s32.totalorder %s18, 1
      %p85 = por %p83, %p84
      %p86 = scmp.ne.s32.totalorder %s77, %s78
      %p87 = scmp.eq.s32.totalorder %s18, 0
      %p88 = por %p86, %p87
      %p89 = scmp.ne.s32.totalorder %s77, %s78
      %p90 = scmp.eq.s32.totalorder %s19, 1
      %p91 = por %p89, %p90
      %p93 = scmp.ne.s32.totalorder %s78, %s92
      %p94 = scmp.eq.s32.totalorder %s19, 0
      %p95 = por %p93, %p94
      %s96 = ssub.s32 %s20, %s32
      %p97 = scmp.eq.s32.totalorder %s96, 0
      %s99 = sadd.s32 %s98, 1
      %s100 = scalar_select %p97, %s98, %s99
      %p103 = pneg %p97
      %p104 = scmp.eq.s32.totalorder %s13, 1
      %p105 = por %p103, %p104
      %p106 = scmp.ne.s32.totalorder %s98, %s101
      %p107 = scmp.eq.s32.totalorder %s13, 0
      %p108 = por %p106, %p107
      %p109 = scmp.ne.s32.totalorder %s98, %s101
      %p110 = scmp.eq.s32.totalorder %s18, 1
      %p111 = por %p109, %p110
      %p112 = scmp.ne.s32.totalorder %s101, %s102
      %p113 = scmp.eq.s32.totalorder %s18, 0
      %p114 = por %p112, %p113
      %p115 = scmp.ne.s32.totalorder %s101, %s102
      %p116 = scmp.eq.s32.totalorder %s19, 1
      %p117 = por %p115, %p116
      %p119 = scmp.ne.s32.totalorder %s102, %s118
      %p120 = scmp.eq.s32.totalorder %s19, 0
      %p121 = por %p119, %p120
      %p122 = scmp.le.s32.totalorder 1, %s13
      %p123 = scmp.lt.s32.totalorder %s13, 3
      %p124 = pnand %p122, %p123
      %p125 = pneg %p124
      // Predicated region
      $region9: #{tpu_custom_call.1} parent=5 // pred_check
        _
      $region10: #{tpu_custom_call.1} parent=5 // pred_check_branch
        %127 = sbr.rel (%p124) target = $region12
      $region11: #{tpu_custom_call.1} parent=5 // pred_region
        %s128 = ssub.s32 %s13, 1
        // Predicated region
        $region13: #{tpu_custom_call.1} parent=11 // pred_check
          %p129 = pneg %p46
        $region14: #{tpu_custom_call.1} parent=11 // pred_check_branch
          %131 = sbr.rel (%p129) target = $region16
        $region15: #{tpu_custom_call.1} parent=11 // pred_region
          _
        $region16: #{tpu_custom_call.1} parent=11 // pred_fallthru
          _
        // Predicated region
        $region17: #{tpu_custom_call.1} parent=11 // pred_check
          %p132 = pneg %p67
        $region18: #{tpu_custom_call.1} parent=11 // pred_check_branch
          %134 = sbr.rel (%p132) target = $region20
        $region19: #{tpu_custom_call.1} parent=11 // pred_region
          %s136 = ssub.s32 512, 256
          %137 = vsyncadd [#allocation4], %s136
          %s138 = sshll.u32 [#allocation3], 4
          %s139 = int_to_ptr.vmem [resolvable:$true] %s138
          %144 = dma.hbm_to_vmem [thread:$0]  %s1, 256, %s139, [#allocation4], 128, 128, 8
        $region20: #{tpu_custom_call.1} parent=11 // pred_fallthru
          _
        // Predicated region
        $region21: #{tpu_custom_call.1} parent=11 // pred_check
          %p145 = pneg %p88
        $region22: #{tpu_custom_call.1} parent=11 // pred_check_branch
          %147 = sbr.rel (%p145) target = $region24
        $region23: #{tpu_custom_call.1} parent=11 // pred_region
          _
        $region24: #{tpu_custom_call.1} parent=11 // pred_fallthru
          _
      $region12: #{tpu_custom_call.1} parent=5 // pred_fallthru
        _
      %p148 = scmp.lt.s32.totalorder %s13, 2
      // Predicated region
      $region25: #{tpu_custom_call.1} parent=5 // pred_check
        %p149 = pneg %p148
      $region26: #{tpu_custom_call.1} parent=5 // pred_check_branch
        %151 = sbr.rel (%p149) target = $region28
      $region27: #{tpu_custom_call.1} parent=5 // pred_region
        _
      $region28: #{tpu_custom_call.1} parent=5 // pred_fallthru
        _
      %p152 = scmp.le.s32.totalorder 1, %s13
      %p153 = scmp.lt.s32.totalorder %s13, 3
      %p154 = pnand %p152, %p153
      %p155 = pneg %p154
      // Predicated region
      $region29: #{tpu_custom_call.1} parent=5 // pred_check
        _
      $region30: #{tpu_custom_call.1} parent=5 // pred_check_branch
        %157 = sbr.rel (%p154) target = $region32
      $region31: #{tpu_custom_call.1} parent=5 // pred_region
        %s158 = ssub.s32 %s13, 1
        // Predicated region
        $region33: #{tpu_custom_call.1} parent=31 // pred_check
          %p159 = pneg %p67
        $region34: #{tpu_custom_call.1} parent=31 // pred_check_branch
          %161 = sbr.rel (%p159) target = $region36
        $region35: #{tpu_custom_call.1} parent=31 // pred_region
          %162 = dma.done [#allocation4], 512
        $region36: #{tpu_custom_call.1} parent=31 // pred_fallthru
          _
        %p163 = pneg %p46
        %p164 = pneg %p43
        %p165 = pneg %p67
        %p166 = pneg %p64
        %p167 = pneg %p88
        %p168 = pneg %p85
        %p169 = pneg %p114
        %p170 = pneg %p111
        %s171 = sand.u32 %s101, 1
        %s172 = scalar_lea.sflag [#allocation5], %s171
        %s173 = sand.u32 %s101, 1
        %s174 = scalar_lea.vmem [#allocation6], %s173
        %p175 = scmp.eq.s32.totalorder %s23, 0
        // Predicated region
        $region37: #{tpu_custom_call.1} parent=31 // pred_check
          %p176 = pneg %p175
        $region38: #{tpu_custom_call.1} parent=31 // pred_check_branch
          %178 = sbr.rel (%p176) target = $region40
        $region39: #{tpu_custom_call.1} parent=31 // pred_region
          %vm179 = vcmask 0
          %180 = vst.msk [vmem:[#allocation2] sm:$0x1] %vm179, 0.0
        $region40: #{tpu_custom_call.1} parent=31 // pred_fallthru
          _
        %v181 = vld [vmem:[%s0] sm:$0xff]
        %v182 = vld [vmem:[%s0 + $0x8] sm:$0xff]
        %v183 = vld [vmem:[%s0 + $0x10] sm:$0xff]
        %v184 = vld [vmem:[%s0 + $0x18] sm:$0xff]
        %v185 = vld [vmem:[#allocation3] sm:$0xff]
        %v186 = vld [vmem:[#allocation3 + $0x8] sm:$0xff]
        %v187 = vld [vmem:[#allocation3 + $0x10] sm:$0xff]
        %v188 = vld [vmem:[#allocation3 + $0x18] sm:$0xff]
        %v189 = vld [vmem:[%s2] sm:$0xff]
        %v190 = vld [vmem:[%s2 + $0x8] sm:$0xff]
        %v191 = vld [vmem:[%s2 + $0x10] sm:$0xff]
        %v192 = vld [vmem:[%s2 + $0x18] sm:$0xff]
        %v193 = vsub.f32 %v181, %v185
        %v194 = vsub.f32 %v182, %v186
        %v195 = vsub.f32 %v183, %v187
        %v196 = vsub.f32 %v184, %v188
        %v197 = vadd.f32 %v193, 1e-06
        %v198 = vadd.f32 %v194, 1e-06
        %v199 = vadd.f32 %v195, 1e-06
        %v200 = vadd.f32 %v196, 1e-06
        %v201 = vmul.f32 %v197, %v197
        %v202 = vmul.f32 %v198, %v198
        %v203 = vmul.f32 %v199, %v199
        %v204 = vmul.f32 %v200, %v200
        %vm205 = vcmask 261120
        %v206 = vsel %vm205, %v201, 0.0
        %207 = vadd.xlane.f32.xlu0 %v206
        %v208 = vpop.xlane.xlu0 %207
        %v209 = vsel %vm205, %v202, 0.0
        %210 = vadd.xlane.f32.xlu0 %v209
        %v211 = vpop.xlane.xlu0 %210
        %v212 = vsel %vm205, %v203, 0.0
        %213 = vadd.xlane.f32.xlu0 %v212
        %v214 = vpop.xlane.xlu0 %213
        %v215 = vsel %vm205, %v204, 0.0
        %216 = vadd.xlane.f32.xlu0 %v215
        %v217 = vpop.xlane.xlu0 %216
        %v218 = vrsqrt.pop %v208
        %v219 = vmul.f32 %v208, %v218
        %vm220 = vcmp.eq.f32.partialorder %v208, inf
        %v221 = vsel %vm220, %v208, %v219
        %vm222 = vcmp.eq.f32.partialorder %v208, 0.0
        %v223 = vand.u32 %v208, 2147483648
        %v224 = vsel %vm222, %v223, %v221
        %v225 = vrsqrt.pop %v211
        %v226 = vmul.f32 %v211, %v225
        %vm227 = vcmp.eq.f32.partialorder %v211, inf
        %v228 = vsel %vm227, %v211, %v226
        %vm229 = vcmp.eq.f32.partialorder %v211, 0.0
        %v230 = vand.u32 %v211, 2147483648
        %v231 = vsel %vm229, %v230, %v228
        %v232 = vrsqrt.pop %v214
        %v233 = vmul.f32 %v214, %v232
        %vm234 = vcmp.eq.f32.partialorder %v214, inf
        %v235 = vsel %vm234, %v214, %v233
        %vm236 = vcmp.eq.f32.partialorder %v214, 0.0
        %v237 = vand.u32 %v214, 2147483648
        %v238 = vsel %vm236, %v237, %v235
        %v239 = vrsqrt.pop %v217
        %v240 = vmul.f32 %v217, %v239
        %vm241 = vcmp.eq.f32.partialorder %v217, inf
        %v242 = vsel %vm241, %v217, %v240
        %vm243 = vcmp.eq.f32.partialorder %v217, 0.0
        %v244 = vand.u32 %v217, 2147483648
        %v245 = vsel %vm243, %v244, %v242
        %v246 = vsub.f32 2.0, %v224
        %v247 = vsub.f32 2.0, %v231
        %v248 = vsub.f32 2.0, %v238
        %v249 = vsub.f32 2.0, %v245
        %v250 = vmax.f32 %v246, 0.0
        %v251 = vmax.f32 %v247, 0.0
        %v252 = vmax.f32 %v248, 0.0
        %v253 = vmax.f32 %v249, 0.0
        %v254 = vsub.f32 1.0, %v189
        %v255 = vsub.f32 1.0, %v190
        %v256 = vsub.f32 1.0, %v191
        %v257 = vsub.f32 1.0, %v192
        %v258 = vmul.f32 %v254, %v208
        %v259 = vmul.f32 %v255, %v211
        %v260 = vmul.f32 %v256, %v214
        %v261 = vmul.f32 %v257, %v217
        %v262 = vmul.f32 %v250, %v250
        %v263 = vmul.f32 %v251, %v251
        %v264 = vmul.f32 %v252, %v252
        %v265 = vmul.f32 %v253, %v253
        %v266 = vmul.f32 %v189, %v262
        %v267 = vmul.f32 %v190, %v263
        %v268 = vmul.f32 %v191, %v264
        %v269 = vmul.f32 %v192, %v265
        %v270 = vadd.f32 %v258, %v266
        %v271 = vadd.f32 %v259, %v267
        %v272 = vadd.f32 %v260, %v268
        %v273 = vadd.f32 %v261, %v269
        %s274 = sadd.s32 %s22, %s23
        %s275 = smul.u32 %s274, 32
        %s276 = sadd.s32 %s275, 32
        %p277 = scmp.le.s32.totalorder %s276, 13
        // Predicated region
        $region41: #{tpu_custom_call.1} parent=31 // pred_check
          %p278 = pneg %p277
        $region42: #{tpu_custom_call.1} parent=31 // pred_check_branch
          %280 = sbr.rel (%p278) target = $region44
        $region43: #{tpu_custom_call.1} parent=31 // pred_region
          %v281 = vld [vmem:[#allocation2] sm:$0x1]
          %vm282 = vcmask 7168
          %v283 = vsel %vm282, %v270, 0.0
          %v284 = vsel %vm282, %v271, 0.0
          %v285 = vadd.f32 %v283, %v284
          %v286 = vsel %vm282, %v272, 0.0
          %v287 = vadd.f32 %v285, %v286
          %v288 = vsel %vm282, %v273, 0.0
          %v289 = vadd.f32 %v287, %v288
          %290 = vadd.xlane.f32.xlu0 %v289
          %v291 = vpop.xlane.xlu0 %290
          %v292 = vrot.slane %v291, 4
          %v293 = vadd.f32 %v291, %v292
          %v294 = vrot.slane %v293, 2
          %v295 = vadd.f32 %v293, %v294
          %v296 = vrot.slane %v295, 1
          %v297 = vadd.f32 %v295, %v296
          %s298 = vtos %v297
          %v299 = vstv %s298
          %v300 = vadd.f32 %v281, %v299
          %vm301 = vcmask 0
          %302 = vst.msk [vmem:[#allocation2] sm:$0x1] %vm301, %v300
        $region44: #{tpu_custom_call.1} parent=31 // pred_fallthru
          _
        %p303 = scmp.gt.s32.totalorder %s276, 13
        // Predicated region
        $region45: #{tpu_custom_call.1} parent=31 // pred_check
          %p304 = pneg %p303
        $region46: #{tpu_custom_call.1} parent=31 // pred_check_branch
          %306 = sbr.rel (%p304) target = $region48
        $region47: #{tpu_custom_call.1} parent=31 // pred_region
          %v307 = vlaneseq
          %v308 = vshrl.u32 %v307, 7
          %v309 = vadd.s32 %v308, 8
          %v310 = vadd.s32 %v308, 16
          %v311 = vadd.s32 %v308, 24
          %v312 = vstv %s275
          %v313 = vadd.s32 %v308, %v312
          %v314 = vadd.s32 %v309, %v312
          %v315 = vadd.s32 %v310, %v312
          %v316 = vadd.s32 %v311, %v312
          %vm317 = vcmp.lt.s32.totalorder %v313, 13
          %vm318 = vcmp.lt.s32.totalorder %v314, 13
          %vm319 = vcmp.lt.s32.totalorder %v315, 13
          %vm320 = vcmp.lt.s32.totalorder %v316, 13
          %v321 = vsel %vm317, %v270, 0.0
          %v322 = vsel %vm318, %v271, 0.0
          %v323 = vsel %vm319, %v272, 0.0
          %v324 = vsel %vm320, %v273, 0.0
          %v325 = vld [vmem:[#allocation2] sm:$0x1]
          %vm326 = vcmask 7168
          %v327 = vsel %vm326, %v321, 0.0
          %v328 = vsel %vm326, %v322, 0.0
          %v329 = vadd.f32 %v327, %v328
          %v330 = vsel %vm326, %v323, 0.0
          %v331 = vadd.f32 %v329, %v330
          %v332 = vsel %vm326, %v324, 0.0
          %v333 = vadd.f32 %v331, %v332
          %334 = vadd.xlane.f32.xlu0 %v333
          %v335 = vpop.xlane.xlu0 %334
          %v336 = vrot.slane %v335, 4
          %v337 = vadd.f32 %v335, %v336
          %v338 = vrot.slane %v337, 2
          %v339 = vadd.f32 %v337, %v338
          %v340 = vrot.slane %v339, 1
          %v341 = vadd.f32 %v339, %v340
          %s342 = vtos %v341
          %v343 = vstv %s342
          %v344 = vadd.f32 %v325, %v343
          %vm345 = vcmask 0
          %346 = vst.msk [vmem:[#allocation2] sm:$0x1] %vm345, %v344
        $region48: #{tpu_custom_call.1} parent=31 // pred_fallthru
          _
        // Predicated region
        $region49: #{tpu_custom_call.1} parent=31 // pred_check
          %p347 = pneg %p175
        $region50: #{tpu_custom_call.1} parent=31 // pred_check_branch
          %349 = sbr.rel (%p347) target = $region52
        $region51: #{tpu_custom_call.1} parent=31 // pred_region
          %v350 = vld [vmem:[#allocation2] sm:$0x1]
          %352 = vset.pattern.permute.xlu0 0
          %353 = vperm.xlu0 %352, %v350
          %v354 = vpop.permute.xlu0 %353
          %v356 = vlaneseq
          %v357 = vshrl.u32 %v356, 7
          %v358 = vsub.s32 0, %v357
          %v359 = vrot.slane %v354, %v358
          %360 = vst [vmem:[%s174] sm:$0x1] %v359
        $region52: #{tpu_custom_call.1} parent=31 // pred_fallthru
          _
        %s361 = sand.u32 %s101, 1
        %s362 = scalar_lea.sflag [#allocation5], %s361
        %s363 = sand.u32 %s101, 1
        %s364 = scalar_lea.vmem [#allocation6], %s363
        // Predicated region
        $region53: #{tpu_custom_call.1} parent=31 // pred_check
          %p365 = pneg %p111
        $region54: #{tpu_custom_call.1} parent=31 // pred_check_branch
          %367 = sbr.rel (%p365) target = $region56
        $region55: #{tpu_custom_call.1} parent=31 // pred_region
          %s369 = ssub.s32 16, 16
          %370 = vsyncadd %s362, %s369
          %s371 = smul.addr %s22, 16
          %s372 = scalar_lea.hbm %s3, %s371
          %s374 = sshll.u32 %s364, 4
          %s375 = int_to_ptr.vmem [resolvable:$true] %s374
          %377 = dma.vmem_to_hbm [thread:$0]  %s375, 16, %s372, %s362
        $region56: #{tpu_custom_call.1} parent=31 // pred_fallthru
          _
      $region32: #{tpu_custom_call.1} parent=5 // pred_fallthru
        _
      %p378 = scmp.le.s32.totalorder 2, %s13
      // Predicated region
      $region57: #{tpu_custom_call.1} parent=5 // pred_check
        %p379 = pneg %p378
      $region58: #{tpu_custom_call.1} parent=5 // pred_check_branch
        %381 = sbr.rel (%p379) target = $region60
      $region59: #{tpu_custom_call.1} parent=5 // pred_region
        %s382 = ssub.s32 %s13, 2
        // Predicated region
        $region61: #{tpu_custom_call.1} parent=59 // pred_check
          %p383 = pneg %p117
        $region62: #{tpu_custom_call.1} parent=59 // pred_check_branch
          %385 = sbr.rel (%p383) target = $region64
        $region63: #{tpu_custom_call.1} parent=59 // pred_region
          %s386 = sand.u32 %s102, 1
          %s387 = scalar_lea.sflag [#allocation5], %s386
          %s388 = sand.u32 %s102, 1
          %s389 = scalar_lea.vmem [#allocation6], %s388
          %390 = dma.done %s387, 16
        $region64: #{tpu_custom_call.1} parent=59 // pred_fallthru
          _
      $region60: #{tpu_custom_call.1} parent=5 // pred_fallthru
        _
    $region6: #{tpu_custom_call.1} parent=1 // loop_footer
      %s17 = sadd.s32 1, %s13
    $region7: #{tpu_custom_call.1} parent=1 // loop_footer_branch
      %12 = sbr.rel target = $region3
    $region8: #{tpu_custom_call.1} parent=1 // loop_exit
      _
    %391 = vsyncpa [#allocation4], 1
    %s392 = scalar_lea.sflag [#allocation4], 1
    %393 = vsyncpa %s392, 1
    %394 = vsyncpa [#allocation5], 1
    %s395 = scalar_lea.sflag [#allocation5], 1
    %396 = vsyncpa %s395, 1

</llo_original>
